<compile_context>
chip_gen: v7x
topology: tpu7x:2x2x1
jax: 0.10.0
libtpu: 0.0.40
codegen_flags: <defaults>
</compile_context>

<pallas_src>
import jax
import jax.numpy as jnp
from jax.experimental import pallas as pl
from jax.experimental.pallas import tpu as pltpu


# Leave headroom under the 32 MiB scoped-VMEM default present on every generation
# (v7x physical VMEM is only 64 MiB, so we do not grow tiles past this).
_VMEM_TILE_BUDGET = 24 * 1024 * 1024


def actor_part2_kernel(t_ref, p_ref, w_ref, b_ref, o_ref):
    # relu(thoughts + padding): elementwise, the lane-packed layout is transparent.
    x = jnp.maximum(t_ref[...] + p_ref[...], 0.0)
    # (Block-diagonal) linear2: bf16 operands, f32 accumulate on the MXU.
    y = jnp.dot(x.astype(w_ref.dtype), w_ref[...],
                preferred_element_type=jnp.float32) + b_ref[...]
    # sigmoid: exp on the EUP, approximate reciprocal also on the EUP -> the whole
    # epilogue stays out of the VALU slots; lane-dense 128-wide store.
    o_ref[...] = pl.reciprocal(1.0 + jnp.exp(-y), approx=True).astype(o_ref.dtype)


def _round_up(x, m):
    return (x + m - 1) // m * m


def _tensorcores_per_chip():
    # Heuristic: v5e / v6e expose one TensorCore per chip; v4 / v5p (megacore) and
    # v7x have two that dimension_semantics=("parallel",) can shard across.
    try:
        kind = jax.devices()[0].device_kind.lower()
    except Exception:
        return 1
    if "lite" in kind or "v5e" in kind or "v6" in kind:
        return 1
    return 2


def _choose_tile(n_packed, packed_in_bytes, packed_out_bytes, tile_packed_rows, num_tc):
    """Pick (tile_packed_rows, grid_m) respecting the (8,128) rule and VMEM budget."""
    # Double-buffered VMEM bytes per packed row in a tile (2 inputs + 1 output).
    per_row = 2 * (2 * packed_in_bytes + packed_out_bytes)
    vmem_cap = max(8, (_VMEM_TILE_BUDGET // per_row) // 8 * 8)
    tg = max(8, min(tile_packed_rows, vmem_cap) // 8 * 8)

    if num_tc > 1 and n_packed >= num_tc * 8:
        # Multi-TensorCore chips: make the grid a multiple of the core count so the
        # "parallel" axis load-balances evenly (avoid e.g. 3 steps on 2 cores).
        grid_m = pl.cdiv(n_packed, tg)
        target = _round_up(max(grid_m, num_tc), num_tc)
        tg = min(tg, _round_up(pl.cdiv(n_packed, target), 8))

    if tg >= n_packed:
        # Whole problem fits one tile: use the exact extent (block == full dim, so
        # no ragged block, and no pointless grid split on single-TC chips).
        return n_packed, 1
    return tg, pl.cdiv(n_packed, tg)


def _actor_part2_pallas(thoughts, padding, w_bd, b_p, *, a_dim, group, tile_rows, num_tc):
    N, H = thoughts.shape
    G, A = group, a_dim

    # Pad only to the next multiple of G so the lane-packing reshape is a free
    # row-major re-view.  In the common case (N % G == 0) this is a no-op and no
    # HBM copy happens at all; tile misalignment is left to the ragged last block.
    n_g = _round_up(N, G)
    if n_g != N:
        pad = ((0, n_g - N), (0, 0))
        thoughts = jnp.pad(thoughts, pad)
        padding = jnp.pad(padding, pad)

    n_packed = n_g // G
    t_p = thoughts.reshape(n_packed, G * H)
    p_p = padding.reshape(n_packed, G * H)

    tg, grid_m = _choose_tile(
        n_packed,
        packed_in_bytes=G * H * 4,
        packed_out_bytes=G * A * 4,
        tile_packed_rows=max(1, tile_rows // G),
        num_tc=num_tc)

    out_packed = pl.pallas_call(
        actor_part2_kernel,
        out_shape=jax.ShapeDtypeStruct((n_packed, G * A), jnp.float32),
        grid=(grid_m,),
        in_specs=[
            pl.BlockSpec((tg, G * H), lambda i: (i, 0)),
            pl.BlockSpec((tg, G * H), lambda i: (i, 0)),
            pl.BlockSpec((G * H, G * A), lambda i: (0, 0)),   # grid-invariant weight
            pl.BlockSpec((1, G * A), lambda i: (0, 0)),       # grid-invariant bias
        ],
        out_specs=pl.BlockSpec((tg, G * A), lambda i: (i, 0)),
        compiler_params=pltpu.CompilerParams(
            dimension_semantics=("parallel",)),
    )(t_p, p_p, w_bd, b_p)

    # Un-pack (free row-major reshape), drop the <G pad rows, and mirror the
    # module's final `.reshape(-1, a_dim)` (a no-op at this shape).
    return out_packed.reshape(n_g, A)[:N]


def make_actor_part2(w2, b2, *, tile_rows=32768, min_pallas_rows=1024):
    """Build the fused ActorPart2 forward.

    w2: (hidden, a_dim) f32  -- PyTorch linear2.weight, pre-transposed.
    b2: (a_dim,) or (1, a_dim) f32.
    Returns: forward(thoughts, padding) -> (rows, a_dim) f32.

    The lane-packed block-diagonal weight (kron(I_G, w2), stored bf16) and the
    tiled bias are built ONCE here (module init), not per forward call.
    """
    w2 = jnp.asarray(w2, jnp.float32)
    H, A = w2.shape
    b2 = jnp.asarray(b2, jnp.float32).reshape(1, A)

    # Rows packed per 128-lane output row.  Fallback G=1 (lane-sparse but correct)
    # when a_dim does not divide 128.
    G = 128 // A if (A <= 128 and 128 % A == 0) else 1
    w_bd = jnp.kron(jnp.eye(G, dtype=jnp.float32), w2).astype(jnp.bfloat16)
    b_p = jnp.tile(b2, (1, G))

    num_tc = _tensorcores_per_chip()

    def _xla_path(thoughts, padding):
        x = jnp.maximum(thoughts + padding, 0.0)
        return jax.nn.sigmoid(x @ w2 + b2).reshape(-1, A)

    @jax.jit
    def forward(thoughts, padding):
        N = thoughts.shape[0]
        if N < min_pallas_rows:
            # Tiny batches: the fused XLA expression beats the pallas_call +
            # packing overhead.
            return _xla_path(thoughts, padding)
        return _actor_part2_pallas(
            thoughts, padding, w_bd, b_p,
            a_dim=A, group=G, tile_rows=tile_rows, num_tc=num_tc)

    return forward


def reference(thoughts, padding, w2, b2):
    x = jnp.maximum(thoughts + padding, 0.0)
    y = jax.nn.sigmoid(x @ w2 + b2.reshape(1, -1))
    return y.reshape(-1, w2.shape[1])


if __name__ == "__main__":
    # Shapes consistent with the module: hidden_size=32, action_shape=(16,),
    # batch_size=2, num_adversaries=4 -> rows = batch * n_agents = 8.
    hidden = 32
    a_dim = 16
    batch, n_agents = 2, 4
    rows = batch * n_agents

    key = jax.random.PRNGKey(0)
    kt, kp, kw, kb = jax.random.split(key, 4)
    thoughts = jax.random.normal(kt, (rows, hidden), dtype=jnp.float32)
    padding = jax.random.normal(kp, (rows, hidden), dtype=jnp.float32)
    # PyTorch Linear weight is (a_dim, hidden); stored here pre-transposed (hidden, a_dim).
    w2 = jax.random.normal(kw, (hidden, a_dim), dtype=jnp.float32) * 0.1
    b2 = jax.random.normal(kb, (1, a_dim), dtype=jnp.float32) * 0.1

    # min_pallas_rows=0 forces the Pallas path even at this tiny size so the kernel
    # itself is exercised (production callers keep the default small-N fast path).
    forward = make_actor_part2(w2, b2, min_pallas_rows=0)

    out = jax.block_until_ready(forward(thoughts, padding))
    ref = reference(thoughts, padding, w2, b2)
    assert out.shape == (rows, a_dim), out.shape
    # bf16 matmul operands + approx reciprocal shift results by ~1e-3.
    assert jnp.allclose(out, ref, atol=5e-3, rtol=5e-3), "mismatch vs reference (small)"

    # Second check: exercises the N % G remainder and the ragged last tile with a
    # multi-step grid (small tile_rows forces >1 grid step).
    rows2 = 1003
    k2t, k2p = jax.random.split(jax.random.PRNGKey(1))
    t2 = jax.random.normal(k2t, (rows2, hidden), dtype=jnp.float32)
    p2 = jax.random.normal(k2p, (rows2, hidden), dtype=jnp.float32)
    forward_small_tiles = make_actor_part2(w2, b2, tile_rows=512, min_pallas_rows=0)
    out2 = jax.block_until_ready(forward_small_tiles(t2, p2))
    ref2 = reference(t2, p2, w2, b2)
    assert out2.shape == (rows2, a_dim), out2.shape
    assert jnp.allclose(out2, ref2, atol=5e-3, rtol=5e-3), "mismatch vs reference (ragged)"

    print("KERNEL_OK")
</pallas_src>

<mosaic_0001>
module attributes {stable_mosaic.version = 11 : i64} {
  func.func @actor_part2_kernel(%arg0: i32, %arg1: memref<1x256xf32, #tpu.memory_space<vmem>>, %arg2: memref<1x256xf32, #tpu.memory_space<vmem>>, %arg3: memref<256x128xbf16, #tpu.memory_space<vmem>>, %arg4: memref<1x128xf32, #tpu.memory_space<vmem>>, %arg5: memref<1x128xf32, #tpu.memory_space<vmem>>) attributes {dimension_semantics = [#tpu.dimension_semantics<parallel>], iteration_bounds = array<i64: 1>, scalar_prefetch = 0 : i64, scratch_operands = 0 : i64, tpu.core_type = #tpu.core_type<tc>, window_params = [{transform_indices = @transform_0, window_bounds = array<i64: 1, 256>}, {transform_indices = @transform_1, window_bounds = array<i64: 1, 256>}, {pipeline_mode = #tpu.pipeline_mode<synchronous>, transform_indices = @transform_2, window_bounds = array<i64: 256, 128>}, {pipeline_mode = #tpu.pipeline_mode<synchronous>, transform_indices = @transform_3, window_bounds = array<i64: 1, 128>}, {transform_indices = @transform_4, window_bounds = array<i64: 1, 128>}]} {
    %c0 = arith.constant 0 : index
    %c0_0 = arith.constant 0 : index
    %0 = vector.load %arg1[%c0, %c0_0] : memref<1x256xf32, #tpu.memory_space<vmem>>, vector<1x256xf32>
    %c0_1 = arith.constant 0 : index
    %c0_2 = arith.constant 0 : index
    %1 = vector.load %arg2[%c0_1, %c0_2] : memref<1x256xf32, #tpu.memory_space<vmem>>, vector<1x256xf32>
    %2 = arith.addf %0, %1 : vector<1x256xf32>
    %cst = arith.constant 0.000000e+00 : f32
    %3 = vector.broadcast %cst : f32 to vector<1x256xf32>
    %4 = arith.maximumf %2, %3 : vector<1x256xf32>
    %5 = arith.truncf %4 : vector<1x256xf32> to vector<1x256xbf16>
    %c0_3 = arith.constant 0 : index
    %c0_4 = arith.constant 0 : index
    %6 = vector.load %arg3[%c0_3, %c0_4] : memref<256x128xbf16, #tpu.memory_space<vmem>>, vector<256x128xbf16>
    %cst_5 = arith.constant dense<0.000000e+00> : vector<1x128xf32>
    %7 = tpu.matmul %5, %6, %cst_5 {dimension_numbers = #tpu.dot_dimension_numbers<[1], [0], [0], [1], [0, 0, 1, 1], [], []>} : vector<1x256xbf16>, vector<256x128xbf16>, vector<1x128xf32> -> vector<1x128xf32>
    %c0_6 = arith.constant 0 : index
    %c0_7 = arith.constant 0 : index
    %8 = vector.load %arg4[%c0_6, %c0_7] : memref<1x128xf32, #tpu.memory_space<vmem>>, vector<1x128xf32>
    %9 = arith.addf %7, %8 : vector<1x128xf32>
    %cst_8 = arith.constant 0.000000e+00 : f32
    %10 = vector.broadcast %cst_8 : f32 to vector<1x128xf32>
    %11 = arith.subf %10, %9 : vector<1x128xf32>
    %12 = math.exp %11 : vector<1x128xf32>
    %cst_9 = arith.constant 1.000000e+00 : f32
    %13 = vector.broadcast %cst_9 : f32 to vector<1x128xf32>
    %14 = arith.addf %13, %12 : vector<1x128xf32>
    %15 = tpu.reciprocal %14 {approx = true} : vector<1x128xf32> -> vector<1x128xf32>
    %c0_10 = arith.constant 0 : index
    %c0_11 = arith.constant 0 : index
    %16 = vector.load %arg5[%c0_10, %c0_11] : memref<1x128xf32, #tpu.memory_space<vmem>>, vector<1x128xf32>
    tpu.vector_store %arg5[%c0_10, %c0_11], %15 {strides = array<i32>} : memref<1x128xf32, #tpu.memory_space<vmem>>, vector<1x128xf32>,
    return
  }
  func.func @transform_0(%arg0: i32) -> (i32, i32) {
    %c0_i32 = arith.constant 0 : i32
    %c0_i32_0 = arith.constant 0 : i32
    return %arg0, %c0_i32 : i32, i32
  }
  func.func @transform_1(%arg0: i32) -> (i32, i32) {
    %c0_i32 = arith.constant 0 : i32
    %c0_i32_0 = arith.constant 0 : i32
    return %arg0, %c0_i32 : i32, i32
  }
  func.func @transform_2(%arg0: i32) -> (i32, i32) {
    %c0_i32 = arith.constant 0 : i32
    %c0_i32_0 = arith.constant 0 : i32
    %c0_i32_1 = arith.constant 0 : i32
    return %c0_i32, %c0_i32_0 : i32, i32
  }
  func.func @transform_3(%arg0: i32) -> (i32, i32) {
    %c0_i32 = arith.constant 0 : i32
    %c0_i32_0 = arith.constant 0 : i32
    %c0_i32_1 = arith.constant 0 : i32
    return %c0_i32, %c0_i32_0 : i32, i32
  }
  func.func @transform_4(%arg0: i32) -> (i32, i32) {
    %c0_i32 = arith.constant 0 : i32
    %c0_i32_0 = arith.constant 0 : i32
    return %arg0, %c0_i32 : i32, i32
  }
}

</mosaic_0001>

<llo_original>
// kernel: forward.1
$region0: #{forward.1}
  #allocation0 [shape = 'u32[]', space=smem, size = 0x4, offset = 0x4, fixed_abs, tag = 'smem constant byte address 0x4 - core index']
  #allocation1 [shape = 'u32[144,128]{1,0:T(1,128)}', space=vmem, size = 0x12000, scoped, tag = 'internal scratch']
  %s0 = inlined_call_operand.vmem [shape: f32[1,256], index: 0, kind: input, shape index: {}]
  %s1 = inlined_call_operand.vmem [shape: f32[1,256], index: 1, kind: input, shape index: {}]
  %s2 = inlined_call_operand.hbm [shape: bf16[256,128], index: 2, kind: input, shape index: {}]
  %s3 = inlined_call_operand.vmem [shape: f32[1,128], index: 3, kind: input, shape index: {}]
  %s4 = inlined_call_operand.vmem [shape: f32[1,128], index: 4, kind: output, shape index: {}]
  %s5 = sld [smem:[#allocation0]]
  $region30: #{forward.1} parent=0
    _
  %s7 = ssub.s32 1, %s5
  %s8 = scalar_select 0, %s7, %s5
  $region1: #{forward.1} parent=0
    #allocation2 [shape = 'u8[65536]{0}', space=vmem, size = 0x10000, scoped, tag = 'input window, operand 2, single buffered']
    #allocation3 [shape = 's32[1]{0}', space=sflag, size = 0x4, scoped, tag = 'scoped memory for forward.1']
    %9 = vsyncpa [#allocation3], 0
    // Predicated region
    $region2: #{forward.1} parent=1 // pred_check
      _
    $region3: #{forward.1} parent=1 // pred_check_branch
      %11 = sbr.rel (0) target = $region5
    $region4: #{forward.1} parent=1 // pred_region
      _
    $region5: #{forward.1} parent=1 // pred_fallthru
      _
    // Predicated region
    $region6: #{forward.1} parent=1 // pred_check
      _
    $region7: #{forward.1} parent=1 // pred_check_branch
      %13 = sbr.rel (0) target = $region9
    $region8: #{forward.1} parent=1 // pred_region
      _
    $region9: #{forward.1} parent=1 // pred_fallthru
      _
    // Predicated region
    $region10: #{forward.1} parent=1 // pred_check
      _
    $region11: #{forward.1} parent=1 // pred_check_branch
      %15 = sbr.rel (0) target = $region13
    $region12: #{forward.1} parent=1 // pred_region
      %s17 = ssub.s32 2048, 2048
      %18 = vsyncadd [#allocation3], %s17
      %s19 = sshll.u32 [#allocation2], 4
      %s20 = int_to_ptr.vmem [resolvable:$true] %s19
      %25 = dma.hbm_to_vmem [thread:$0]  %s2, 2048, %s20, [#allocation3], 64, 64, 4
    $region13: #{forward.1} parent=1 // pred_fallthru
      _
    // Predicated region
    $region14: #{forward.1} parent=1 // pred_check
      _
    $region15: #{forward.1} parent=1 // pred_check_branch
      %27 = sbr.rel (0) target = $region17
    $region16: #{forward.1} parent=1 // pred_region
      _
    $region17: #{forward.1} parent=1 // pred_fallthru
      _
    // Predicated region
    $region18: #{forward.1} parent=1 // pred_check
      _
    $region19: #{forward.1} parent=1 // pred_check_branch
      %29 = sbr.rel (0) target = $region21
    $region20: #{forward.1} parent=1 // pred_region
      %30 = dma.done [#allocation3], 2048
    $region21: #{forward.1} parent=1 // pred_fallthru
      _
    %v32 = vld [vmem:[%s0] sm:$0x3]
    %v33 = vld [vmem:[%s1] sm:$0x3]
    %v34 = vadd.f32 %v32, %v33
    %v35 = vmax.f32 %v34, 0.0
    %v37 = vlaneseq
    %v38 = vshrl.u32 %v37, 7
    %v39 = vsub.s32 0, %v38
    %v40 = vrot.slane %v35, %v39
    %v41 = vlaneseq
    %v42 = vshrl.u32 %v41, 7
    %v43 = vsub.s32 1, %v42
    %v44 = vrot.slane %v35, %v43
    %v47 = vpack.c.bf16 %v40, %v40
    %v48 = vpack.c.bf16 %v44, %v44
    %v49 = vld [vmem:[#allocation2] sm:$0xf]
    %v50 = vld [vmem:[#allocation2 + $0x4] sm:$0xf]
    %v51 = vld [vmem:[#allocation2 + $0x8] sm:$0xf]
    %v52 = vld [vmem:[#allocation2 + $0xc] sm:$0xf]
    %v53 = vld [vmem:[#allocation2 + $0x10] sm:$0xf]
    %v54 = vld [vmem:[#allocation2 + $0x14] sm:$0xf]
    %v55 = vld [vmem:[#allocation2 + $0x18] sm:$0xf]
    %v56 = vld [vmem:[#allocation2 + $0x1c] sm:$0xf]
    %v57 = vld [vmem:[#allocation2 + $0x20] sm:$0xf]
    %v58 = vld [vmem:[#allocation2 + $0x24] sm:$0xf]
    %v59 = vld [vmem:[#allocation2 + $0x28] sm:$0xf]
    %v60 = vld [vmem:[#allocation2 + $0x2c] sm:$0xf]
    %v61 = vld [vmem:[#allocation2 + $0x30] sm:$0xf]
    %v62 = vld [vmem:[#allocation2 + $0x34] sm:$0xf]
    %v63 = vld [vmem:[#allocation2 + $0x38] sm:$0xf]
    %v64 = vld [vmem:[#allocation2 + $0x3c] sm:$0xf]
    %v65 = vld [vmem:[#allocation2 + $0x40] sm:$0xf]
    %v66 = vld [vmem:[#allocation2 + $0x44] sm:$0xf]
    %v67 = vld [vmem:[#allocation2 + $0x48] sm:$0xf]
    %v68 = vld [vmem:[#allocation2 + $0x4c] sm:$0xf]
    %v69 = vld [vmem:[#allocation2 + $0x50] sm:$0xf]
    %v70 = vld [vmem:[#allocation2 + $0x54] sm:$0xf]
    %v71 = vld [vmem:[#allocation2 + $0x58] sm:$0xf]
    %v72 = vld [vmem:[#allocation2 + $0x5c] sm:$0xf]
    %v73 = vld [vmem:[#allocation2 + $0x60] sm:$0xf]
    %v74 = vld [vmem:[#allocation2 + $0x64] sm:$0xf]
    %v75 = vld [vmem:[#allocation2 + $0x68] sm:$0xf]
    %v76 = vld [vmem:[#allocation2 + $0x6c] sm:$0xf]
    %v77 = vld [vmem:[#allocation2 + $0x70] sm:$0xf]
    %v78 = vld [vmem:[#allocation2 + $0x74] sm:$0xf]
    %v79 = vld [vmem:[#allocation2 + $0x78] sm:$0xf]
    %v80 = vld [vmem:[#allocation2 + $0x7c] sm:$0xf]
    %v81 = vld [vmem:[%s3] sm:$0x1]
    %v114 = vunpack.c.l.b16 %v49
    %v115 = vunpack.c.l.b16 %v50
    %v116 = vunpack.c.l.b16 %v51
    %v117 = vunpack.c.l.b16 %v52
    %v118 = vunpack.c.l.b16 %v53
    %v119 = vunpack.c.l.b16 %v54
    %v120 = vunpack.c.l.b16 %v55
    %v121 = vunpack.c.l.b16 %v56
    %v122 = vunpack.c.l.b16 %v57
    %v123 = vunpack.c.l.b16 %v58
    %v124 = vunpack.c.l.b16 %v59
    %v125 = vunpack.c.l.b16 %v60
    %v126 = vunpack.c.l.b16 %v61
    %v127 = vunpack.c.l.b16 %v62
    %v128 = vunpack.c.l.b16 %v63
    %v129 = vunpack.c.l.b16 %v64
    %v130 = vunpack.c.l.b16 %v65
    %v131 = vunpack.c.l.b16 %v66
    %v132 = vunpack.c.l.b16 %v67
    %v133 = vunpack.c.l.b16 %v68
    %v134 = vunpack.c.l.b16 %v69
    %v135 = vunpack.c.l.b16 %v70
    %v136 = vunpack.c.l.b16 %v71
    %v137 = vunpack.c.l.b16 %v72
    %v138 = vunpack.c.l.b16 %v73
    %v139 = vunpack.c.l.b16 %v74
    %v140 = vunpack.c.l.b16 %v75
    %v141 = vunpack.c.l.b16 %v76
    %v142 = vunpack.c.l.b16 %v77
    %v143 = vunpack.c.l.b16 %v78
    %v144 = vunpack.c.l.b16 %v79
    %v145 = vunpack.c.l.b16 %v80
    %v146 = vpack.c.b16 %v115, %v114
    %v147 = vpack.c.b16 %v117, %v116
    %v148 = vpack.c.b16 %v119, %v118
    %v149 = vpack.c.b16 %v121, %v120
    %v150 = vpack.c.b16 %v123, %v122
    %v151 = vpack.c.b16 %v125, %v124
    %v152 = vpack.c.b16 %v127, %v126
    %v153 = vpack.c.b16 %v129, %v128
    %v154 = vpack.c.b16 %v131, %v130
    %v155 = vpack.c.b16 %v133, %v132
    %v156 = vpack.c.b16 %v135, %v134
    %v157 = vpack.c.b16 %v137, %v136
    %v158 = vpack.c.b16 %v139, %v138
    %v159 = vpack.c.b16 %v141, %v140
    %v160 = vpack.c.b16 %v143, %v142
    %v161 = vpack.c.b16 %v145, %v144
    %178 = vmatprep.subr.bf16.mxu0 0
    %179 = vmatpush1.bf16.msra.mxu0 %v146
    %180 = vmatprep.subr.bf16.mxu0 0
    %181 = vmatpush1.bf16.msra.mxu0 %v147
    %182 = vmatprep.subr.bf16.mxu0 0
    %183 = vmatpush1.bf16.msra.mxu0 %v148
    %184 = vmatprep.subr.bf16.mxu0 0
    %185 = vmatpush1.bf16.msra.mxu0 %v149
    %186 = vmatprep.subr.bf16.mxu0 0
    %187 = vmatpush1.bf16.msra.mxu0 %v150
    %188 = vmatprep.subr.bf16.mxu0 0
    %189 = vmatpush1.bf16.msra.mxu0 %v151
    %190 = vmatprep.subr.bf16.mxu0 0
    %191 = vmatpush1.bf16.msra.mxu0 %v152
    %192 = vmatprep.subr.bf16.mxu0 0
    %193 = vmatpush1.bf16.msra.mxu0 %v153
    %194 = vmatprep.subr.bf16.mxu0 0
    %195 = vmatpush1.bf16.msra.mxu0 %v154
    %196 = vmatprep.subr.bf16.mxu0 0
    %197 = vmatpush1.bf16.msra.mxu0 %v155
    %198 = vmatprep.subr.bf16.mxu0 0
    %199 = vmatpush1.bf16.msra.mxu0 %v156
    %200 = vmatprep.subr.bf16.mxu0 0
    %201 = vmatpush1.bf16.msra.mxu0 %v157
    %202 = vmatprep.subr.bf16.mxu0 0
    %203 = vmatpush1.bf16.msra.mxu0 %v158
    %204 = vmatprep.subr.bf16.mxu0 0
    %205 = vmatpush1.bf16.msra.mxu0 %v159
    %206 = vmatprep.subr.bf16.mxu0 0
    %207 = vmatpush1.bf16.msra.mxu0 %v160
    %208 = vmatprep.subr.bf16.mxu0 0
    %209 = vmatpush1.bf16.msra.mxu0 %v161
    %210 = vmatprep.mubr.bf16.mxu0 %v48
    %211 = vmatmul.mubr.bf16.gmra.mrb[0].mxu0 %v47
    %v212 = vpop.f32.mrb[0].mxu0
    %v213 = vadd.f32 %v81, %v212
    %v214 = vpop.f32.mrb[0].mxu0
    %v215 = vpop.f32.mrb[0].mxu0
    %v216 = vpop.f32.mrb[0].mxu0
    %217 = vdwg.mxu0
    %v218 = vsub.f32 0.0, %v213
    %v219 = vmul.f32 %v218, 1.442695
    %v220 = vpow.pop %v219
    %v221 = vadd.f32 %v220, 1.0
    %v222 = vrcp.pop %v221
    %223 = vst [vmem:[%s4] sm:$0x1] %v222
    // Predicated region
    $region22: #{forward.1} parent=1 // pred_check
      _
    $region23: #{forward.1} parent=1 // pred_check_branch
      %225 = sbr.rel (0) target = $region25
    $region24: #{forward.1} parent=1 // pred_region
      _
    $region25: #{forward.1} parent=1 // pred_fallthru
      _
    // Predicated region
    $region26: #{forward.1} parent=1 // pred_check
      _
    $region27: #{forward.1} parent=1 // pred_check_branch
      %227 = sbr.rel (0) target = $region29
    $region28: #{forward.1} parent=1 // pred_region
      _
    $region29: #{forward.1} parent=1 // pred_fallthru
      _
    %228 = vsyncpa [#allocation3], 1

</llo_original>
